<compile_context>
chip_gen: v7x
topology: tpu7x:2x2x1
jax: 0.10.0
libtpu: 0.0.40
codegen_flags: <defaults>
</compile_context>

<pallas_src>
import functools

import jax
import jax.numpy as jnp
from jax.experimental import pallas as pl
from jax.experimental.pallas import tpu as pltpu


MAX_TILE_ROWS = 512        # 512 * 1024 * 4 B = 2 MiB f32 output per block
TARGET_GRID_STEPS = 8      # aim for >=4 steps/TC so v7x's two TCs both get work
_LANE_CANDIDATES = (1024, 512, 256, 128)


def _round_up(x, m):
    return ((x + m - 1) // m) * m


def _pick_lane_width(n):
    for w in _LANE_CANDIDATES:
        if n % w == 0:
            return w
    return None


def _to_tensor_kernel(x_ref, o_ref, *, rescale):
    v = x_ref[...].astype(jnp.float32)
    if rescale:
        # Exact division (matches torchvision's .div(255) bit-for-bit); hidden under DMA.
        v = v / 255.0
    o_ref[...] = v


def to_tensor(img, bboxes, *, max_tile_rows=MAX_TILE_ROWS):
    """JAX/Pallas equivalent of ToTensor.forward(img, bboxes).

    - Float input (the `isinstance(img, torch.Tensor)` branch): identity pass-through.
    - uint8 HWC image: converted to CHW float32 in [0, 1] via a tiled Pallas kernel.
    - other integer HWC image: converted to CHW float32 WITHOUT the /255 rescale
      (torchvision only rescales byte images).
    `bboxes` is returned unchanged in both branches.
    """
    if jnp.issubdtype(img.dtype, jnp.floating):
        # Already a "tensor": identity branch, no kernel launch.
        return img, bboxes

    rescale = img.dtype == jnp.uint8

    # Layout glue on the cheap (uint8) side: HWC -> CHW.  XLA fuses this with the
    # reshape below into a single pass over the uint8 data.
    chw = jnp.transpose(img, (2, 0, 1))
    C, H, W = chw.shape
    n = C * H * W

    # Lane-dense 2D view with NO padding: pick a lane width that divides n exactly.
    lane_w = _pick_lane_width(n)
    if lane_w is not None:
        x2d = chw.reshape(n // lane_w, lane_w)
    else:
        # Fallback: last dim = full array extent (always a legal block dim); zero-copy.
        x2d = chw.reshape(C * H, W)
        lane_w = W
    rows = x2d.shape[0]

    # Tile rows: multiple of 32 (uint8 (32,128) packing), aim for ~TARGET_GRID_STEPS
    # grid steps, capped so double-buffered VMEM stays small on every generation.
    max_tile_rows = max(32, (int(max_tile_rows) // 32) * 32)
    if rows <= 32:
        tile_rows = rows                      # single full-extent block
    else:
        tile_rows = _round_up(pl.cdiv(rows, TARGET_GRID_STEPS), 32)
        tile_rows = min(max(tile_rows, 32), max_tile_rows)

    grid = (pl.cdiv(rows, tile_rows),)        # ragged last block is masked by Pallas

    out2d = pl.pallas_call(
        functools.partial(_to_tensor_kernel, rescale=rescale),
        out_shape=jax.ShapeDtypeStruct((rows, lane_w), jnp.float32),
        grid=grid,
        in_specs=[pl.BlockSpec((tile_rows, lane_w), lambda i: (i, 0))],
        out_specs=pl.BlockSpec((tile_rows, lane_w), lambda i: (i, 0)),
        compiler_params=pltpu.CompilerParams(
            dimension_semantics=("parallel",)),
        cost_estimate=pl.CostEstimate(
            flops=n, transcendentals=0,
            bytes_accessed=n * (x2d.dtype.itemsize + 4)),
    )(x2d)

    # Exact-size view: no slice, no copy.
    out = out2d.reshape(C, H, W)
    return out, bboxes


def _ref_to_tensor(img):
    x = jnp.transpose(img.astype(jnp.float32), (2, 0, 1))
    return x / 255.0 if img.dtype == jnp.uint8 else x


if __name__ == "__main__":
    key = jax.random.PRNGKey(0)
    k_img, k_img2, k_img3, k_box = jax.random.split(key, 4)

    # --- Small HWC uint8 "PIL-style" image + a handful of bboxes (single-block path,
    #     n = 768 -> lane width 256, rows = 3, grid = (1,)).
    H, W, C = 16, 16, 3
    img = jax.random.randint(k_img, (H, W, C), 0, 256, dtype=jnp.int32).astype(jnp.uint8)
    bboxes = jax.random.uniform(k_box, (5, 4), dtype=jnp.float32) * jnp.float32(W)

    out_img, out_bboxes = to_tensor(img, bboxes)
    jax.block_until_ready(out_img)
    jax.block_until_ready(out_bboxes)

    ref = _ref_to_tensor(img)
    assert out_img.shape == (C, H, W), out_img.shape
    assert out_img.dtype == jnp.float32
    assert jnp.allclose(out_img, ref, atol=1e-6)
    assert jnp.array_equal(out_bboxes, bboxes)

    # --- Larger image with a small tile cap: n = 49152 -> lane width 1024, rows = 48,
    #     tile_rows = 32, grid = (2,) with a ragged (16-row) masked last block.
    H2, W2, C2 = 128, 128, 3
    img2 = jax.random.randint(k_img2, (H2, W2, C2), 0, 256, dtype=jnp.int32).astype(jnp.uint8)
    out_img2, _ = to_tensor(img2, bboxes, max_tile_rows=32)
    jax.block_until_ready(out_img2)
    assert out_img2.shape == (C2, H2, W2)
    assert jnp.allclose(out_img2, _ref_to_tensor(img2), atol=1e-6)

    # --- Awkward shape exercising the no-pad fallback path: n = 765 (no 128-multiple
    #     divisor) -> view (45, 17), full-extent lane dim, grid = (2,).
    H3, W3, C3 = 15, 17, 3
    img3 = jax.random.randint(k_img3, (H3, W3, C3), 0, 256, dtype=jnp.int32).astype(jnp.uint8)
    out_img3, _ = to_tensor(img3, bboxes)
    jax.block_until_ready(out_img3)
    assert out_img3.shape == (C3, H3, W3)
    assert jnp.allclose(out_img3, _ref_to_tensor(img3), atol=1e-6)

    # --- Branch 1: img is already a (float) tensor -> identity pass-through.
    same_img, same_boxes = to_tensor(out_img, bboxes)
    assert same_img is out_img
    assert same_boxes is bboxes

    print("KERNEL_OK")
</pallas_src>

<mosaic_0001>
module attributes {stable_mosaic.version = 11 : i64} {
  func.func @_to_tensor_kernel(%arg0: i32, %arg1: memref<3x256xi8, #tpu.memory_space<vmem>>, %arg2: memref<3x256xf32, #tpu.memory_space<vmem>>) attributes {dimension_semantics = [#tpu.dimension_semantics<parallel>], iteration_bounds = array<i64: 1>, scalar_prefetch = 0 : i64, scratch_operands = 0 : i64, tpu.core_type = #tpu.core_type<tc>, window_params = [{transform_indices = @transform_0, window_bounds = array<i64: 3, 256>}, {transform_indices = @transform_1, window_bounds = array<i64: 3, 256>}]} {
    %c0 = arith.constant 0 : index
    %c0_0 = arith.constant 0 : index
    %0 = vector.load %arg1[%c0, %c0_0] : memref<3x256xi8, #tpu.memory_space<vmem>>, vector<3x256xi8>
    %1 = arith.uitofp %0 : vector<3x256xi8> to vector<3x256xf32>
    %cst = arith.constant 2.550000e+02 : f32
    %2 = vector.broadcast %cst : f32 to vector<3x256xf32>
    %3 = arith.divf %1, %2 : vector<3x256xf32>
    %c0_1 = arith.constant 0 : index
    %c0_2 = arith.constant 0 : index
    %4 = vector.load %arg2[%c0_1, %c0_2] : memref<3x256xf32, #tpu.memory_space<vmem>>, vector<3x256xf32>
    tpu.vector_store %arg2[%c0_1, %c0_2], %3 {strides = array<i32>} : memref<3x256xf32, #tpu.memory_space<vmem>>, vector<3x256xf32>,
    return
  }
  func.func @transform_0(%arg0: i32) -> (i32, i32) {
    %c0_i32 = arith.constant 0 : i32
    %c0_i32_0 = arith.constant 0 : i32
    return %arg0, %c0_i32 : i32, i32
  }
  func.func @transform_1(%arg0: i32) -> (i32, i32) {
    %c0_i32 = arith.constant 0 : i32
    %c0_i32_0 = arith.constant 0 : i32
    return %arg0, %c0_i32 : i32, i32
  }
}

</mosaic_0001>

<llo_original>
// kernel: tpu_custom_call.1
$region0: #{tpu_custom_call.1}
  #allocation0 [shape = 'u32[]', space=smem, size = 0x4, offset = 0x4, fixed_abs, tag = 'smem constant byte address 0x4 - core index']
  #allocation1 [shape = 'u32[144,128]{1,0:T(1,128)}', space=vmem, size = 0x12000, scoped, tag = 'internal scratch']
  %s0 = inlined_call_operand.hbm [shape: u8[3,256], index: 0, kind: input, shape index: {}]
  %s1 = inlined_call_operand.hbm [shape: f32[3,256], index: 1, kind: output, shape index: {}]
  %s2 = sld [smem:[#allocation0]]
  $region18: #{tpu_custom_call.1} parent=0
    _
  %s4 = ssub.s32 1, %s2
  %s5 = scalar_select 0, %s4, %s2
  $region1: #{tpu_custom_call.1} parent=0
    #allocation2 [shape = 'u8[1024]{0}', space=vmem, size = 0x400, scoped, tag = 'input window, operand 0, single buffered']
    #allocation3 [shape = 's32[1]{0}', space=sflag, size = 0x4, scoped, tag = 'scoped memory for tpu_custom_call.1']
    #allocation4 [shape = 's32[1]{0}', space=sflag, size = 0x4, scoped, tag = 'scoped memory for tpu_custom_call.1']
    #allocation5 [shape = 'u8[4096]{0}', space=vmem, size = 0x1000, scoped, tag = 'output window, operand 0, single buffered']
    %6 = vsyncpa [#allocation3], 0
    %7 = vsyncpa [#allocation4], 0
    // Predicated region
    $region2: #{tpu_custom_call.1} parent=1 // pred_check
      _
    $region3: #{tpu_custom_call.1} parent=1 // pred_check_branch
      %9 = sbr.rel (0) target = $region5
    $region4: #{tpu_custom_call.1} parent=1 // pred_region
      %s11 = ssub.s32 32, 32
      %12 = vsyncadd [#allocation3], %s11
      %s14 = sshll.u32 [#allocation2], 4
      %s15 = int_to_ptr.vmem [resolvable:$true] %s14
      %17 = dma.hbm_to_vmem [thread:$0]  %s0, 32, %s15, [#allocation3]
    $region5: #{tpu_custom_call.1} parent=1 // pred_fallthru
      _
    // Predicated region
    $region6: #{tpu_custom_call.1} parent=1 // pred_check
      _
    $region7: #{tpu_custom_call.1} parent=1 // pred_check_branch
      %19 = sbr.rel (0) target = $region9
    $region8: #{tpu_custom_call.1} parent=1 // pred_region
      %20 = dma.done [#allocation3], 32
    $region9: #{tpu_custom_call.1} parent=1 // pred_fallthru
      _
    %v21 = vld [vmem:[#allocation2] sm:$0x3]
    %v22 = vunpack.c.0.s8 %v21
    %v23 = vand.u32 %v22, 255
    %v24 = vcvt.s32.f32 %v23
    %v25 = vrcp.pop 255.0
    %v26 = vmul.f32 %v24, %v25
    %27 = vst [vmem:[#allocation5] sm:$0x77] %v26
    // Predicated region
    $region10: #{tpu_custom_call.1} parent=1 // pred_check
      _
    $region11: #{tpu_custom_call.1} parent=1 // pred_check_branch
      %29 = sbr.rel (0) target = $region13
    $region12: #{tpu_custom_call.1} parent=1 // pred_region
      %s31 = ssub.s32 128, 128
      %32 = vsyncadd [#allocation4], %s31
      %s34 = sshll.u32 [#allocation5], 4
      %s35 = int_to_ptr.vmem [resolvable:$true] %s34
      %37 = dma.vmem_to_hbm [thread:$0]  %s35, 128, %s1, [#allocation4]
    $region13: #{tpu_custom_call.1} parent=1 // pred_fallthru
      _
    // Predicated region
    $region14: #{tpu_custom_call.1} parent=1 // pred_check
      _
    $region15: #{tpu_custom_call.1} parent=1 // pred_check_branch
      %39 = sbr.rel (0) target = $region17
    $region16: #{tpu_custom_call.1} parent=1 // pred_region
      %40 = dma.done [#allocation4], 128
    $region17: #{tpu_custom_call.1} parent=1 // pred_fallthru
      _
    %41 = vsyncpa [#allocation3], 1
    %42 = vsyncpa [#allocation4], 1

</llo_original>
